<compile_context>
chip_gen: v6e
topology: v6e:2x2x1
jax: 0.10.0
libtpu: 0.0.40
codegen_flags: <defaults>
</compile_context>

<pallas_src>
import jax
import jax.numpy as jnp
from jax.experimental import pallas as pl
from jax.experimental.pallas import tpu as pltpu

LANE = 128  # TPU lane width: hidden dim padded to this for lane-dense matmuls.


def _round_up(x, m):
    return ((x + m - 1) // m) * m


def _pad_to(a, shape):
    """Zero-pad `a` up to `shape` (per-dim, trailing)."""
    return jnp.pad(a, [(0, t - s) for s, t in zip(a.shape, shape)])


def mlp_kernel(x_ref, w1_ref, b1_ref, w2_ref, b2_ref, w3_ref, b3_ref, o_ref):
    # All-f32 path: memory/overhead-bound kernel, so f32 MXU passes are free
    # and keep accuracy close to the PyTorch f32 forward.
    h1 = jnp.dot(x_ref[...], w1_ref[...], preferred_element_type=jnp.float32)
    h1 = jnp.maximum(h1 + b1_ref[...], 0.0)
    # (Dropout = identity in eval mode.)
    h2 = jnp.dot(h1, w2_ref[...], preferred_element_type=jnp.float32)
    h2 = jnp.maximum(h2 + b2_ref[...], 0.0)
    # Final layer writes only the true out_f lanes (narrow output block).
    out = jnp.dot(h2, w3_ref[...], preferred_element_type=jnp.float32)
    o_ref[...] = (out + b3_ref[...]).astype(o_ref.dtype)


def init_params(key, input_features, output_features, hidden_units=64):
    """nn.Linear-style init (uniform +-1/sqrt(fan_in)). Weights stored (in, out)."""
    ks = jax.random.split(key, 6)

    def linear(kw, kb, fan_in, fan_out):
        bound = 1.0 / jnp.sqrt(fan_in)
        w = jax.random.uniform(kw, (fan_in, fan_out), jnp.float32, -bound, bound)
        b = jax.random.uniform(kb, (1, fan_out), jnp.float32, -bound, bound)
        return w, b

    w1, b1 = linear(ks[0], ks[1], input_features, hidden_units)
    w2, b2 = linear(ks[2], ks[3], hidden_units, hidden_units)
    w3, b3 = linear(ks[4], ks[5], hidden_units, output_features)
    return {"w1": w1, "b1": b1, "w2": w2, "b2": b2, "w3": w3, "b3": b3}


def prepare_params(params):
    """Pad the hidden dim to 128 lanes (zero padding is inert through ReLU and
    the following matmuls); keep the true output width and f32 everywhere."""
    in_f, hidden = params["w1"].shape
    out_f = params["w3"].shape[1]
    H = _round_up(hidden, LANE)
    return {
        "w1": _pad_to(params["w1"], (in_f, H)).astype(jnp.float32),
        "b1": _pad_to(params["b1"], (1, H)).astype(jnp.float32),
        "w2": _pad_to(params["w2"], (H, H)).astype(jnp.float32),
        "b2": _pad_to(params["b2"], (1, H)).astype(jnp.float32),
        "w3": _pad_to(params["w3"], (H, out_f)).astype(jnp.float32),
        "b3": params["b3"].astype(jnp.float32),
    }


def _pick_tm(batch, tm_max=512, min_tiles=4):
    """Pick the batch row-tile.

    Large tiles amortize the ~0.35us/step grid overhead (mem-bound kernels hit
    ~85% of HBM roofline at 512-1024 rows), but we keep >= `min_tiles` grid
    steps so v7x's two TensorCores each get >= 2 pipelined steps. Multiple of 8
    (sublane requirement).
    """
    tm = _round_up(max(pl.cdiv(batch, min_tiles), 8), 8)
    return max(8, min(tm_max, tm))


def static_gesture_forward(x, prepared, *, tm=None):
    """x: (B, input_features) f32. Returns (B, output_features) f32 logits."""
    B, in_f = x.shape
    H = prepared["w1"].shape[1]
    out_f = prepared["w3"].shape[1]
    if tm is None:
        tm = _pick_tm(B)
    n_tiles = pl.cdiv(B, tm)  # last block may be partial: OOB writes are dropped

    # VMEM footprint at tm=512: x 64 KiB + out 16 KiB (each double-buffered)
    # + ~85 KiB resident weights  ->  well under every generation's scoped VMEM.
    weight_bytes = sum(int(v.size) * v.dtype.itemsize for v in prepared.values())
    cost = pl.CostEstimate(
        flops=2 * B * (in_f * H + H * H + H * out_f),
        transcendentals=0,
        bytes_accessed=B * in_f * 4 + B * out_f * 4 + weight_bytes,
    )

    # Weights/biases: constant index_map -> DMA'd once, resident across steps.
    const_spec = lambda shape: pl.BlockSpec(shape, lambda i: (0, 0))

    return pl.pallas_call(
        mlp_kernel,
        out_shape=jax.ShapeDtypeStruct((B, out_f), jnp.float32),
        grid=(n_tiles,),
        in_specs=[
            pl.BlockSpec((tm, in_f), lambda i: (i, 0)),  # x: tiled over batch
            const_spec(prepared["w1"].shape),
            const_spec(prepared["b1"].shape),
            const_spec(prepared["w2"].shape),
            const_spec(prepared["b2"].shape),
            const_spec(prepared["w3"].shape),
            const_spec(prepared["b3"].shape),
        ],
        # Narrow (tm, out_f) output block: last dim == full array dim (legal);
        # writes only 32 useful bytes/row instead of a 128-lane padded slab.
        out_specs=pl.BlockSpec((tm, out_f), lambda i: (i, 0)),
        compiler_params=pltpu.CompilerParams(
            dimension_semantics=("parallel",),  # shard batch grid across TCs
            vmem_limit_bytes=32 * 1024 * 1024,
        ),
        cost_estimate=cost,
    )(x, prepared["w1"], prepared["b1"], prepared["w2"], prepared["b2"],
      prepared["w3"], prepared["b3"])


def reference_forward_f32(x, params):
    """Plain-JAX equivalent of the PyTorch forward (eval mode)."""
    h1 = jnp.maximum(x @ params["w1"] + params["b1"], 0.0)
    h2 = jnp.maximum(h1 @ params["w2"] + params["b2"], 0.0)
    return h2 @ params["w3"] + params["b3"]


if __name__ == "__main__":
    # 21 hand landmarks -> ~32 input features, 64 hidden units, 8 gesture
    # classes. Batch 384 gives tm=96 and a 4-step grid (2 steps/TC on v7x).
    batch = 384
    input_features = 32
    hidden_units = 64
    output_features = 8

    key = jax.random.PRNGKey(0)
    k_params, k_x = jax.random.split(key)
    params = init_params(k_params, input_features, output_features, hidden_units)
    prepared = prepare_params(params)
    x = jax.random.normal(k_x, (batch, input_features), dtype=jnp.float32)

    out = static_gesture_forward(x, prepared)
    out = jax.block_until_ready(out)
    assert out.shape == (batch, output_features)

    # f32 end-to-end kernel -> tight check against the PyTorch-equivalent
    # f32 forward (remaining delta is only default MXU input rounding).
    ref_f32 = reference_forward_f32(x, params)
    assert jnp.allclose(out, ref_f32, atol=2e-2, rtol=2e-2), \
        "mismatch vs f32 JAX reference"
    assert bool(jnp.all(jnp.isfinite(out))), "non-finite logits"

    print("KERNEL_OK")
</pallas_src>

<mosaic_0001>
module attributes {stable_mosaic.version = 11 : i64} {
  func.func @mlp_kernel(%arg0: i32, %arg1: memref<96x32xf32, #tpu.memory_space<vmem>>, %arg2: memref<32x128xf32, #tpu.memory_space<vmem>>, %arg3: memref<1x128xf32, #tpu.memory_space<vmem>>, %arg4: memref<128x128xf32, #tpu.memory_space<vmem>>, %arg5: memref<1x128xf32, #tpu.memory_space<vmem>>, %arg6: memref<128x8xf32, #tpu.memory_space<vmem>>, %arg7: memref<1x8xf32, #tpu.memory_space<vmem>>, %arg8: memref<96x8xf32, #tpu.memory_space<vmem>>) attributes {dimension_semantics = [#tpu.dimension_semantics<parallel>], iteration_bounds = array<i64: 4>, scalar_prefetch = 0 : i64, scratch_operands = 0 : i64, tpu.core_type = #tpu.core_type<tc>, window_params = [{transform_indices = @transform_0, window_bounds = array<i64: 96, 32>}, {pipeline_mode = #tpu.pipeline_mode<synchronous>, transform_indices = @transform_1, window_bounds = array<i64: 32, 128>}, {pipeline_mode = #tpu.pipeline_mode<synchronous>, transform_indices = @transform_2, window_bounds = array<i64: 1, 128>}, {pipeline_mode = #tpu.pipeline_mode<synchronous>, transform_indices = @transform_3, window_bounds = array<i64: 128, 128>}, {pipeline_mode = #tpu.pipeline_mode<synchronous>, transform_indices = @transform_4, window_bounds = array<i64: 1, 128>}, {pipeline_mode = #tpu.pipeline_mode<synchronous>, transform_indices = @transform_5, window_bounds = array<i64: 128, 8>}, {pipeline_mode = #tpu.pipeline_mode<synchronous>, transform_indices = @transform_6, window_bounds = array<i64: 1, 8>}, {transform_indices = @transform_7, window_bounds = array<i64: 96, 8>}]} {
    %c0 = arith.constant 0 : index
    %c0_0 = arith.constant 0 : index
    %0 = vector.load %arg1[%c0, %c0_0] : memref<96x32xf32, #tpu.memory_space<vmem>>, vector<96x32xf32>
    %c0_1 = arith.constant 0 : index
    %c0_2 = arith.constant 0 : index
    %1 = vector.load %arg2[%c0_1, %c0_2] : memref<32x128xf32, #tpu.memory_space<vmem>>, vector<32x128xf32>
    %cst = arith.constant dense<0.000000e+00> : vector<96x128xf32>
    %2 = tpu.matmul %0, %1, %cst {dimension_numbers = #tpu.dot_dimension_numbers<[1], [0], [0], [1], [0, 0, 1, 1], [], []>} : vector<96x32xf32>, vector<32x128xf32>, vector<96x128xf32> -> vector<96x128xf32>
    %c0_3 = arith.constant 0 : index
    %c0_4 = arith.constant 0 : index
    %3 = vector.load %arg3[%c0_3, %c0_4] : memref<1x128xf32, #tpu.memory_space<vmem>>, vector<1x128xf32>
    %4 = vector.broadcast %3 : vector<1x128xf32> to vector<96x128xf32>
    %5 = arith.addf %2, %4 : vector<96x128xf32>
    %cst_5 = arith.constant 0.000000e+00 : f32
    %6 = vector.broadcast %cst_5 : f32 to vector<96x128xf32>
    %7 = arith.maximumf %5, %6 : vector<96x128xf32>
    %c0_6 = arith.constant 0 : index
    %c0_7 = arith.constant 0 : index
    %8 = vector.load %arg4[%c0_6, %c0_7] : memref<128x128xf32, #tpu.memory_space<vmem>>, vector<128x128xf32>
    %cst_8 = arith.constant dense<0.000000e+00> : vector<96x128xf32>
    %9 = tpu.matmul %7, %8, %cst_8 {dimension_numbers = #tpu.dot_dimension_numbers<[1], [0], [0], [1], [0, 0, 1, 1], [], []>} : vector<96x128xf32>, vector<128x128xf32>, vector<96x128xf32> -> vector<96x128xf32>
    %c0_9 = arith.constant 0 : index
    %c0_10 = arith.constant 0 : index
    %10 = vector.load %arg5[%c0_9, %c0_10] : memref<1x128xf32, #tpu.memory_space<vmem>>, vector<1x128xf32>
    %11 = vector.broadcast %10 : vector<1x128xf32> to vector<96x128xf32>
    %12 = arith.addf %9, %11 : vector<96x128xf32>
    %cst_11 = arith.constant 0.000000e+00 : f32
    %13 = vector.broadcast %cst_11 : f32 to vector<96x128xf32>
    %14 = arith.maximumf %12, %13 : vector<96x128xf32>
    %c0_12 = arith.constant 0 : index
    %c0_13 = arith.constant 0 : index
    %15 = vector.load %arg6[%c0_12, %c0_13] : memref<128x8xf32, #tpu.memory_space<vmem>>, vector<128x8xf32>
    %cst_14 = arith.constant dense<0.000000e+00> : vector<96x8xf32>
    %16 = tpu.matmul %14, %15, %cst_14 {dimension_numbers = #tpu.dot_dimension_numbers<[1], [0], [0], [1], [0, 0, 1, 1], [], []>} : vector<96x128xf32>, vector<128x8xf32>, vector<96x8xf32> -> vector<96x8xf32>
    %c0_15 = arith.constant 0 : index
    %c0_16 = arith.constant 0 : index
    %17 = vector.load %arg7[%c0_15, %c0_16] : memref<1x8xf32, #tpu.memory_space<vmem>>, vector<1x8xf32>
    %18 = vector.broadcast %17 : vector<1x8xf32> to vector<96x8xf32>
    %19 = arith.addf %16, %18 : vector<96x8xf32>
    %c0_17 = arith.constant 0 : index
    %c0_18 = arith.constant 0 : index
    %20 = vector.load %arg8[%c0_17, %c0_18] : memref<96x8xf32, #tpu.memory_space<vmem>>, vector<96x8xf32>
    tpu.vector_store %arg8[%c0_17, %c0_18], %19 {strides = array<i32>} : memref<96x8xf32, #tpu.memory_space<vmem>>, vector<96x8xf32>,
    return
  }
  func.func @transform_0(%arg0: i32) -> (i32, i32) {
    %c0_i32 = arith.constant 0 : i32
    %c0_i32_0 = arith.constant 0 : i32
    return %arg0, %c0_i32 : i32, i32
  }
  func.func @transform_1(%arg0: i32) -> (i32, i32) {
    %c0_i32 = arith.constant 0 : i32
    %c0_i32_0 = arith.constant 0 : i32
    %c0_i32_1 = arith.constant 0 : i32
    return %c0_i32, %c0_i32_0 : i32, i32
  }
  func.func @transform_2(%arg0: i32) -> (i32, i32) {
    %c0_i32 = arith.constant 0 : i32
    %c0_i32_0 = arith.constant 0 : i32
    %c0_i32_1 = arith.constant 0 : i32
    return %c0_i32, %c0_i32_0 : i32, i32
  }
  func.func @transform_3(%arg0: i32) -> (i32, i32) {
    %c0_i32 = arith.constant 0 : i32
    %c0_i32_0 = arith.constant 0 : i32
    %c0_i32_1 = arith.constant 0 : i32
    return %c0_i32, %c0_i32_0 : i32, i32
  }
  func.func @transform_4(%arg0: i32) -> (i32, i32) {
    %c0_i32 = arith.constant 0 : i32
    %c0_i32_0 = arith.constant 0 : i32
    %c0_i32_1 = arith.constant 0 : i32
    return %c0_i32, %c0_i32_0 : i32, i32
  }
  func.func @transform_5(%arg0: i32) -> (i32, i32) {
    %c0_i32 = arith.constant 0 : i32
    %c0_i32_0 = arith.constant 0 : i32
    %c0_i32_1 = arith.constant 0 : i32
    return %c0_i32, %c0_i32_0 : i32, i32
  }
  func.func @transform_6(%arg0: i32) -> (i32, i32) {
    %c0_i32 = arith.constant 0 : i32
    %c0_i32_0 = arith.constant 0 : i32
    %c0_i32_1 = arith.constant 0 : i32
    return %c0_i32, %c0_i32_0 : i32, i32
  }
  func.func @transform_7(%arg0: i32) -> (i32, i32) {
    %c0_i32 = arith.constant 0 : i32
    %c0_i32_0 = arith.constant 0 : i32
    return %arg0, %c0_i32 : i32, i32
  }
}

</mosaic_0001>

<llo_original>
// kernel: tpu_custom_call.1
$region0: #{tpu_custom_call.1}
  #allocation0 [shape = 'u32[]', space=smem, size = 0x4, offset = 0x4, fixed_abs, tag = 'smem constant byte address 0x4 - core index']
  #allocation1 [shape = 'u32[144,128]{1,0:T(1,128)}', space=vmem, size = 0x12000, scoped, tag = 'internal scratch']
  %s0 = inlined_call_operand.vmem [shape: f32[384,32], index: 0, kind: input, shape index: {}]
  %s1 = inlined_call_operand.vmem [shape: f32[32,128], index: 1, kind: input, shape index: {}]
  %s2 = inlined_call_operand.vmem [shape: f32[1,128], index: 2, kind: input, shape index: {}]
  %s3 = inlined_call_operand.vmem [shape: f32[128,128], index: 3, kind: input, shape index: {}]
  %s4 = inlined_call_operand.vmem [shape: f32[1,128], index: 4, kind: input, shape index: {}]
  %s5 = inlined_call_operand.vmem [shape: f32[128,8], index: 5, kind: input, shape index: {}]
  %s6 = inlined_call_operand.vmem [shape: f32[1,8], index: 6, kind: input, shape index: {}]
  %s7 = inlined_call_operand.vmem [shape: f32[384,8], index: 7, kind: output, shape index: {}]
  %s8 = sld [smem:[#allocation0]]
  $region61: #{tpu_custom_call.1} parent=0
    _
  %s10 = ssub.s32 1, %s8
  %s11 = scalar_select 0, %s10, %s8
  loop: start=0, step=1, limit=6
  $region2: #{tpu_custom_call.1} parent=0 // loop_pre_header
    _
  $region3: #{tpu_custom_call.1} parent=0 // loop_header
    %s13 = sphi 0, %s17
    %p14 = scmp.ge.s32.totalorder %s13, 6
    %s23 = sphi 0, %s25
    %s26 = sphi 0, %s23
    %s27 = sphi 0, %s26
    %s43 = sphi 0, %s27
    %s47 = sphi 0, %s47
    %s49 = sphi 0, %s47
    %s50 = sphi 0, %s49
    %s64 = sphi 0, %s50
    %s68 = sphi 0, %s68
    %s70 = sphi 0, %s68
    %s71 = sphi 0, %s70
    %s85 = sphi 0, %s71
    %s89 = sphi 0, %s89
    %s91 = sphi 0, %s89
    %s92 = sphi 0, %s91
    %s106 = sphi 0, %s92
    %s110 = sphi 0, %s110
    %s112 = sphi 0, %s110
    %s113 = sphi 0, %s112
    %s127 = sphi 0, %s113
    %s131 = sphi 0, %s131
    %s133 = sphi 0, %s131
    %s134 = sphi 0, %s133
    %s148 = sphi 0, %s134
    %s152 = sphi 0, %s152
    %s154 = sphi 0, %s152
    %s155 = sphi 0, %s154
    %s169 = sphi 0, %s155
    %s175 = sphi 0, %s177
    %s178 = sphi 0, %s175
    %s179 = sphi 0, %s178
    %s195 = sphi 0, %s179
  $region4: #{tpu_custom_call.1} parent=0 // loop_header_branch
    %16 = sbr.rel (%p14) target = $region8
  $region5: #{tpu_custom_call.1} parent=0 // loop_body
    %s18 = ssub.s32 %s13, 1
    %s19 = ssub.s32 %s13, 2
    %s20 = sadd.s32 %s13, 1
    %s21 = ssub.s32 %s13, %s20
    %p22 = scmp.eq.s32.totalorder %s21, 0
    %s24 = sadd.s32 %s23, 1
    %s25 = scalar_select %p22, %s23, %s24
    %p28 = pneg %p22
    %p29 = scmp.eq.s32.totalorder %s13, 3
    %p30 = por %p28, %p29
    %p31 = scmp.ne.s32.totalorder %s23, %s26
    %p32 = scmp.eq.s32.totalorder %s13, 0
    %p33 = por %p31, %p32
    %p34 = scmp.ne.s32.totalorder %s23, %s26
    %p35 = scmp.eq.s32.totalorder %s18, 3
    %p36 = por %p34, %p35
    %p37 = scmp.ne.s32.totalorder %s26, %s27
    %p38 = scmp.eq.s32.totalorder %s18, 0
    %p39 = por %p37, %p38
    %p40 = scmp.ne.s32.totalorder %s26, %s27
    %p41 = scmp.eq.s32.totalorder %s19, 3
    %p42 = por %p40, %p41
    %p44 = scmp.ne.s32.totalorder %s27, %s43
    %p45 = scmp.eq.s32.totalorder %s19, 0
    %p46 = por %p44, %p45
    %s48 = sadd.s32 %s47, 1
    %p51 = scmp.eq.s32.totalorder %s13, 3
    %p52 = scmp.ne.s32.totalorder %s47, %s49
    %p53 = scmp.eq.s32.totalorder %s13, 0
    %p54 = por %p52, %p53
    %p55 = scmp.ne.s32.totalorder %s47, %s49
    %p56 = scmp.eq.s32.totalorder %s18, 3
    %p57 = por %p55, %p56
    %p58 = scmp.ne.s32.totalorder %s49, %s50
    %p59 = scmp.eq.s32.totalorder %s18, 0
    %p60 = por %p58, %p59
    %p61 = scmp.ne.s32.totalorder %s49, %s50
    %p62 = scmp.eq.s32.totalorder %s19, 3
    %p63 = por %p61, %p62
    %p65 = scmp.ne.s32.totalorder %s50, %s64
    %p66 = scmp.eq.s32.totalorder %s19, 0
    %p67 = por %p65, %p66
    %s69 = sadd.s32 %s68, 1
    %p72 = scmp.eq.s32.totalorder %s13, 3
    %p73 = scmp.ne.s32.totalorder %s68, %s70
    %p74 = scmp.eq.s32.totalorder %s13, 0
    %p75 = por %p73, %p74
    %p76 = scmp.ne.s32.totalorder %s68, %s70
    %p77 = scmp.eq.s32.totalorder %s18, 3
    %p78 = por %p76, %p77
    %p79 = scmp.ne.s32.totalorder %s70, %s71
    %p80 = scmp.eq.s32.totalorder %s18, 0
    %p81 = por %p79, %p80
    %p82 = scmp.ne.s32.totalorder %s70, %s71
    %p83 = scmp.eq.s32.totalorder %s19, 3
    %p84 = por %p82, %p83
    %p86 = scmp.ne.s32.totalorder %s71, %s85
    %p87 = scmp.eq.s32.totalorder %s19, 0
    %p88 = por %p86, %p87
    %s90 = sadd.s32 %s89, 1
    %p93 = scmp.eq.s32.totalorder %s13, 3
    %p94 = scmp.ne.s32.totalorder %s89, %s91
    %p95 = scmp.eq.s32.totalorder %s13, 0
    %p96 = por %p94, %p95
    %p97 = scmp.ne.s32.totalorder %s89, %s91
    %p98 = scmp.eq.s32.totalorder %s18, 3
    %p99 = por %p97, %p98
    %p100 = scmp.ne.s32.totalorder %s91, %s92
    %p101 = scmp.eq.s32.totalorder %s18, 0
    %p102 = por %p100, %p101
    %p103 = scmp.ne.s32.totalorder %s91, %s92
    %p104 = scmp.eq.s32.totalorder %s19, 3
    %p105 = por %p103, %p104
    %p107 = scmp.ne.s32.totalorder %s92, %s106
    %p108 = scmp.eq.s32.totalorder %s19, 0
    %p109 = por %p107, %p108
    %s111 = sadd.s32 %s110, 1
    %p114 = scmp.eq.s32.totalorder %s13, 3
    %p115 = scmp.ne.s32.totalorder %s110, %s112
    %p116 = scmp.eq.s32.totalorder %s13, 0
    %p117 = por %p115, %p116
    %p118 = scmp.ne.s32.totalorder %s110, %s112
    %p119 = scmp.eq.s32.totalorder %s18, 3
    %p120 = por %p118, %p119
    %p121 = scmp.ne.s32.totalorder %s112, %s113
    %p122 = scmp.eq.s32.totalorder %s18, 0
    %p123 = por %p121, %p122
    %p124 = scmp.ne.s32.totalorder %s112, %s113
    %p125 = scmp.eq.s32.totalorder %s19, 3
    %p126 = por %p124, %p125
    %p128 = scmp.ne.s32.totalorder %s113, %s127
    %p129 = scmp.eq.s32.totalorder %s19, 0
    %p130 = por %p128, %p129
    %s132 = sadd.s32 %s131, 1
    %p135 = scmp.eq.s32.totalorder %s13, 3
    %p136 = scmp.ne.s32.totalorder %s131, %s133
    %p137 = scmp.eq.s32.totalorder %s13, 0
    %p138 = por %p136, %p137
    %p139 = scmp.ne.s32.totalorder %s131, %s133
    %p140 = scmp.eq.s32.totalorder %s18, 3
    %p141 = por %p139, %p140
    %p142 = scmp.ne.s32.totalorder %s133, %s134
    %p143 = scmp.eq.s32.totalorder %s18, 0
    %p144 = por %p142, %p143
    %p145 = scmp.ne.s32.totalorder %s133, %s134
    %p146 = scmp.eq.s32.totalorder %s19, 3
    %p147 = por %p145, %p146
    %p149 = scmp.ne.s32.totalorder %s134, %s148
    %p150 = scmp.eq.s32.totalorder %s19, 0
    %p151 = por %p149, %p150
    %s153 = sadd.s32 %s152, 1
    %p156 = scmp.eq.s32.totalorder %s13, 3
    %p157 = scmp.ne.s32.totalorder %s152, %s154
    %p158 = scmp.eq.s32.totalorder %s13, 0
    %p159 = por %p157, %p158
    %p160 = scmp.ne.s32.totalorder %s152, %s154
    %p161 = scmp.eq.s32.totalorder %s18, 3
    %p162 = por %p160, %p161
    %p163 = scmp.ne.s32.totalorder %s154, %s155
    %p164 = scmp.eq.s32.totalorder %s18, 0
    %p165 = por %p163, %p164
    %p166 = scmp.ne.s32.totalorder %s154, %s155
    %p167 = scmp.eq.s32.totalorder %s19, 3
    %p168 = por %p166, %p167
    %p170 = scmp.ne.s32.totalorder %s155, %s169
    %p171 = scmp.eq.s32.totalorder %s19, 0
    %p172 = por %p170, %p171
    %s173 = ssub.s32 %s13, %s20
    %p174 = scmp.eq.s32.totalorder %s173, 0
    %s176 = sadd.s32 %s175, 1
    %s177 = scalar_select %p174, %s175, %s176
    %p180 = pneg %p174
    %p181 = scmp.eq.s32.totalorder %s13, 3
    %p182 = por %p180, %p181
    %p183 = scmp.ne.s32.totalorder %s175, %s178
    %p184 = scmp.eq.s32.totalorder %s13, 0
    %p185 = por %p183, %p184
    %p186 = scmp.ne.s32.totalorder %s175, %s178
    %p187 = scmp.eq.s32.totalorder %s18, 3
    %p188 = por %p186, %p187
    %p189 = scmp.ne.s32.totalorder %s178, %s179
    %p190 = scmp.eq.s32.totalorder %s18, 0
    %p191 = por %p189, %p190
    %p192 = scmp.ne.s32.totalorder %s178, %s179
    %p193 = scmp.eq.s32.totalorder %s19, 3
    %p194 = por %p192, %p193
    %p196 = scmp.ne.s32.totalorder %s179, %s195
    %p197 = scmp.eq.s32.totalorder %s19, 0
    %p198 = por %p196, %p197
    %p199 = scmp.le.s32.totalorder 1, %s13
    %p200 = scmp.lt.s32.totalorder %s13, 5
    %p201 = pnand %p199, %p200
    %p202 = pneg %p201
    // Predicated region
    $region9: #{tpu_custom_call.1} parent=5 // pred_check
      _
    $region10: #{tpu_custom_call.1} parent=5 // pred_check_branch
      %204 = sbr.rel (%p201) target = $region12
    $region11: #{tpu_custom_call.1} parent=5 // pred_region
      %s205 = ssub.s32 %s13, 1
      // Predicated region
      $region13: #{tpu_custom_call.1} parent=11 // pred_check
        %p206 = pneg %p60
      $region14: #{tpu_custom_call.1} parent=11 // pred_check_branch
        %208 = sbr.rel (%p206) target = $region16
      $region15: #{tpu_custom_call.1} parent=11 // pred_region
        _
      $region16: #{tpu_custom_call.1} parent=11 // pred_fallthru
        _
      // Predicated region
      $region17: #{tpu_custom_call.1} parent=11 // pred_check
        %p209 = pneg %p81
      $region18: #{tpu_custom_call.1} parent=11 // pred_check_branch
        %211 = sbr.rel (%p209) target = $region20
      $region19: #{tpu_custom_call.1} parent=11 // pred_region
        _
      $region20: #{tpu_custom_call.1} parent=11 // pred_fallthru
        _
      // Predicated region
      $region21: #{tpu_custom_call.1} parent=11 // pred_check
        %p212 = pneg %p102
      $region22: #{tpu_custom_call.1} parent=11 // pred_check_branch
        %214 = sbr.rel (%p212) target = $region24
      $region23: #{tpu_custom_call.1} parent=11 // pred_region
        _
      $region24: #{tpu_custom_call.1} parent=11 // pred_fallthru
        _
      // Predicated region
      $region25: #{tpu_custom_call.1} parent=11 // pred_check
        %p215 = pneg %p123
      $region26: #{tpu_custom_call.1} parent=11 // pred_check_branch
        %217 = sbr.rel (%p215) target = $region28
      $region27: #{tpu_custom_call.1} parent=11 // pred_region
        _
      $region28: #{tpu_custom_call.1} parent=11 // pred_fallthru
        _
      // Predicated region
      $region29: #{tpu_custom_call.1} parent=11 // pred_check
        %p218 = pneg %p144
      $region30: #{tpu_custom_call.1} parent=11 // pred_check_branch
        %220 = sbr.rel (%p218) target = $region32
      $region31: #{tpu_custom_call.1} parent=11 // pred_region
        _
      $region32: #{tpu_custom_call.1} parent=11 // pred_fallthru
        _
      // Predicated region
      $region33: #{tpu_custom_call.1} parent=11 // pred_check
        %p221 = pneg %p165
      $region34: #{tpu_custom_call.1} parent=11 // pred_check_branch
        %223 = sbr.rel (%p221) target = $region36
      $region35: #{tpu_custom_call.1} parent=11 // pred_region
        _
      $region36: #{tpu_custom_call.1} parent=11 // pred_fallthru
        _
    $region12: #{tpu_custom_call.1} parent=5 // pred_fallthru
      _
    %p224 = scmp.lt.s32.totalorder %s13, 4
    // Predicated region
    $region37: #{tpu_custom_call.1} parent=5 // pred_check
      %p225 = pneg %p224
    $region38: #{tpu_custom_call.1} parent=5 // pred_check_branch
      %227 = sbr.rel (%p225) target = $region40
    $region39: #{tpu_custom_call.1} parent=5 // pred_region
      // Predicated region
      $region41: #{tpu_custom_call.1} parent=39 // pred_check
        %p228 = pneg %p33
      $region42: #{tpu_custom_call.1} parent=39 // pred_check_branch
        %230 = sbr.rel (%p228) target = $region44
      $region43: #{tpu_custom_call.1} parent=39 // pred_region
        %s231 = smul.u32 12, %s13
        %p232 = scmp.lt.s32.totalorder %s231, 47
        %s233 = scalar_select %p232, %s231, 47
        %s234 = smul.addr %s233, 8
        %s235 = scalar_lea.vmem %s0, %s234
        %s236 = smul.u32 12, %s13
      $region44: #{tpu_custom_call.1} parent=39 // pred_fallthru
        _
    $region40: #{tpu_custom_call.1} parent=5 // pred_fallthru
      _
    %p237 = scmp.le.s32.totalorder 1, %s13
    %p238 = scmp.lt.s32.totalorder %s13, 5
    %p239 = pnand %p237, %p238
    %p240 = pneg %p239
    // Predicated region
    $region45: #{tpu_custom_call.1} parent=5 // pred_check
      _
    $region46: #{tpu_custom_call.1} parent=5 // pred_check_branch
      %242 = sbr.rel (%p239) target = $region48
    $region47: #{tpu_custom_call.1} parent=5 // pred_region
      %s243 = ssub.s32 %s13, 1
      %s244 = smul.u32 12, %s18
      %p245 = scmp.lt.s32.totalorder %s244, 47
      %s246 = scalar_select %p245, %s244, 47
      %s247 = smul.addr %s246, 8
      %s248 = scalar_lea.vmem %s0, %s247
      %p249 = pneg %p39
      %p250 = pneg %p36
      %p251 = pneg %p60
      %p252 = pneg %p57
      %p253 = pneg %p81
      %p254 = pneg %p78
      %p255 = pneg %p102
      %p256 = pneg %p99
      %p257 = pneg %p123
      %p258 = pneg %p120
      %p259 = pneg %p144
      %p260 = pneg %p141
      %p261 = pneg %p165
      %p262 = pneg %p162
      %p263 = pneg %p191
      %p264 = pneg %p188
      %s265 = smul.u32 12, %s18
      %p266 = scmp.lt.s32.totalorder %s265, 47
      %s267 = scalar_select %p266, %s265, 47
      %s268 = smul.addr %s267, 8
      %s269 = scalar_lea.vmem %s7, %s268
      %s270 = smul.u32 12, %s18
      %p271 = scmp.lt.s32.totalorder %s270, 47
      %s272 = scalar_select %p271, %s270, 47
      %s273 = smul.addr %s272, 8
      %s274 = scalar_lea.vmem %s0, %s273
      %s275 = smul.u32 12, %s18
      %s276 = smul.u32 12, %s18
      %p277 = scmp.lt.s32.totalorder %s276, 47
      %s278 = scalar_select %p277, %s276, 47
      %s279 = smul.addr %s278, 8
      %s280 = scalar_lea.vmem %s7, %s279
      %s281 = smul.u32 12, %s18
      %v282 = vld [vmem:[%s274] sm:$0xff]
      %v283 = vld [vmem:[%s274 + $0x8] sm:$0xff]
      %v284 = vld [vmem:[%s274 + $0x10] sm:$0xff]
      %v285 = vld [vmem:[%s274 + $0x18] sm:$0xff]
      %v286 = vld [vmem:[%s274 + $0x20] sm:$0xff]
      %v287 = vld [vmem:[%s274 + $0x28] sm:$0xff]
      %v288 = vld [vmem:[%s274 + $0x30] sm:$0xff]
      %v289 = vld [vmem:[%s274 + $0x38] sm:$0xff]
      %v290 = vld [vmem:[%s274 + $0x40] sm:$0xff]
      %v291 = vld [vmem:[%s274 + $0x48] sm:$0xff]
      %v292 = vld [vmem:[%s274 + $0x50] sm:$0xff]
      %v293 = vld [vmem:[%s274 + $0x58] sm:$0xff]
      %v294 = vld [vmem:[%s1] sm:$0xff]
      %v295 = vld [vmem:[%s1 + $0x8] sm:$0xff]
      %v296 = vld [vmem:[%s1 + $0x10] sm:$0xff]
      %v297 = vld [vmem:[%s1 + $0x18] sm:$0xff]
      %v298 = vld [vmem:[%s2] sm:$0x1]
      %v300 = vlaneseq
      %v301 = vshrl.u32 %v300, 7
      %v302 = vsub.s32 0, %v301
      %v303 = vrot.slane %v298, %v302
      %vm305 = vcmask 261120
      %v307 = vsel %vm305, %v282, 0
      %v310 = vsel %vm305, %v283, 0
      %v313 = vsel %vm305, %v284, 0
      %v316 = vsel %vm305, %v285, 0
      %v319 = vsel %vm305, %v286, 0
      %v322 = vsel %vm305, %v287, 0
      %v325 = vsel %vm305, %v288, 0
      %v328 = vsel %vm305, %v289, 0
      %v331 = vsel %vm305, %v290, 0
      %v334 = vsel %vm305, %v291, 0
      %v337 = vsel %vm305, %v292, 0
      %v340 = vsel %vm305, %v293, 0
      %342 = vmatprep.subr.mxu0 0.0
      %343 = vmatpush1.msra.mxu0 0.0
      %344 = vmatprep.subr.mxu0 0.0
      %345 = vmatpush1.msra.mxu0 0.0
      %346 = vmatprep.subr.mxu0 0.0
      %347 = vmatpush1.msra.mxu0 0.0
      %348 = vmatprep.subr.mxu0 0.0
      %349 = vmatpush1.msra.mxu0 0.0
      %350 = vmatprep.subr.mxu0 0.0
      %351 = vmatpush1.msra.mxu0 0.0
      %352 = vmatprep.subr.mxu0 0.0
      %353 = vmatpush1.msra.mxu0 0.0
      %354 = vmatprep.subr.mxu0 0.0
      %355 = vmatpush1.msra.mxu0 0.0
      %356 = vmatprep.subr.mxu0 0.0
      %357 = vmatpush1.msra.mxu0 0.0
      %358 = vmatprep.subr.mxu0 0.0
      %359 = vmatpush1.msra.mxu0 0.0
      %360 = vmatprep.subr.mxu0 0.0
      %361 = vmatpush1.msra.mxu0 0.0
      %362 = vmatprep.subr.mxu0 0.0
      %363 = vmatpush1.msra.mxu0 0.0
      %364 = vmatprep.subr.mxu0 0.0
      %365 = vmatpush1.msra.mxu0 0.0
      %366 = vmatprep.subr.mxu0 0.0
      %367 = vmatpush1.msra.mxu0 %v297
      %368 = vmatprep.subr.mxu0 0.0
      %369 = vmatpush1.msra.mxu0 %v296
      %370 = vmatprep.subr.mxu0 0.0
      %371 = vmatpush1.msra.mxu0 %v295
      %372 = vmatprep.subr.mxu0 0.0
      %373 = vmatpush1.msra.mxu0 %v294
      %374 = vmatprep.subr.mxu0 0.0
      %375 = vmatpush2.msra.mxu0 0.0
      %376 = vmatprep.subr.mxu0 0.0
      %377 = vmatpush2.msra.mxu0 0.0
      %378 = vmatprep.subr.mxu0 0.0
      %379 = vmatpush2.msra.mxu0 0.0
      %380 = vmatprep.subr.mxu0 0.0
      %381 = vmatpush2.msra.mxu0 0.0
      %382 = vmatprep.subr.mxu0 0.0
      %383 = vmatpush2.msra.mxu0 0.0
      %384 = vmatprep.subr.mxu0 0.0
      %385 = vmatpush2.msra.mxu0 0.0
      %386 = vmatprep.subr.mxu0 0.0
      %387 = vmatpush2.msra.mxu0 0.0
      %388 = vmatprep.subr.mxu0 0.0
      %389 = vmatpush2.msra.mxu0 0.0
      %390 = vmatprep.subr.mxu0 0.0
      %391 = vmatpush2.msra.mxu0 0.0
      %392 = vmatprep.subr.mxu0 0.0
      %393 = vmatpush2.msra.mxu0 0.0
      %394 = vmatprep.subr.mxu0 0.0
      %395 = vmatpush2.msra.mxu0 0.0
      %396 = vmatprep.subr.mxu0 0.0
      %397 = vmatpush2.msra.mxu0 0.0
      %398 = vmatprep.subr.mxu0 0.0
      %399 = vmatpush2.msra.mxu0 0.0
      %400 = vmatprep.subr.mxu0 0.0
      %401 = vmatpush2.msra.mxu0 0.0
      %402 = vmatprep.subr.mxu0 0.0
      %403 = vmatpush2.msra.mxu0 0.0
      %404 = vmatprep.subr.mxu0 0.0
      %405 = vmatpush2.msra.mxu0 0.0
      %406 = vmatprep.mubr.f32.mxu0 0.0
      %407 = vmatmul.mubr.f32.gmra.mxu0 %v307
      %v408 = vpop.f32.mrf.mxu0
      %v409 = vadd.f32 %v303, %v408
      %v410 = vpop.f32.mrf.mxu0
      %411 = vmatprep.mubr.f32.mxu0 0.0
      %412 = vmatmul.mubr.f32.gmra.mxu0 %v310
      %v413 = vpop.f32.mrf.mxu0
      %v414 = vadd.f32 %v303, %v413
      %v415 = vpop.f32.mrf.mxu0
      %416 = vmatprep.mubr.f32.mxu0 0.0
      %417 = vmatmul.mubr.f32.gmra.mxu0 %v313
      %v418 = vpop.f32.mrf.mxu0
      %v419 = vadd.f32 %v303, %v418
      %v420 = vpop.f32.mrf.mxu0
      %421 = vmatprep.mubr.f32.mxu0 0.0
      %422 = vmatmul.mubr.f32.gmra.mxu0 %v316
      %v423 = vpop.f32.mrf.mxu0
      %v424 = vadd.f32 %v303, %v423
      %v425 = vpop.f32.mrf.mxu0
      %426 = vmatprep.mubr.f32.mxu0 0.0
      %427 = vmatmul.mubr.f32.gmra.mxu0 %v319
      %v428 = vpop.f32.mrf.mxu0
      %v429 = vadd.f32 %v303, %v428
      %v430 = vpop.f32.mrf.mxu0
      %431 = vmatprep.mubr.f32.mxu0 0.0
      %432 = vmatmul.mubr.f32.gmra.mxu0 %v322
      %v433 = vpop.f32.mrf.mxu0
      %v434 = vadd.f32 %v303, %v433
      %v435 = vpop.f32.mrf.mxu0
      %436 = vmatprep.mubr.f32.mxu0 0.0
      %437 = vmatmul.mubr.f32.gmra.mxu0 %v325
      %v438 = vpop.f32.mrf.mxu0
      %v439 = vadd.f32 %v303, %v438
      %v440 = vpop.f32.mrf.mxu0
      %441 = vmatprep.mubr.f32.mxu0 0.0
      %442 = vmatmul.mubr.f32.gmra.mxu0 %v328
      %v443 = vpop.f32.mrf.mxu0
      %v444 = vadd.f32 %v303, %v443
      %v445 = vpop.f32.mrf.mxu0
      %446 = vmatprep.mubr.f32.mxu0 0.0
      %447 = vmatmul.mubr.f32.gmra.mxu0 %v331
      %v448 = vpop.f32.mrf.mxu0
      %v449 = vadd.f32 %v303, %v448
      %v450 = vpop.f32.mrf.mxu0
      %451 = vmatprep.mubr.f32.mxu0 0.0
      %452 = vmatmul.mubr.f32.gmra.mxu0 %v334
      %v453 = vpop.f32.mrf.mxu0
      %v454 = vadd.f32 %v303, %v453
      %v455 = vpop.f32.mrf.mxu0
      %456 = vmatprep.mubr.f32.mxu0 0.0
      %457 = vmatmul.mubr.f32.gmra.mxu0 %v337
      %v458 = vpop.f32.mrf.mxu0
      %v459 = vadd.f32 %v303, %v458
      %v460 = vpop.f32.mrf.mxu0
      %461 = vmatprep.mubr.f32.mxu0 0.0
      %462 = vmatmul.mubr.f32.gmra.mxu0 %v340
      %v463 = vpop.f32.mrf.mxu0
      %v464 = vadd.f32 %v303, %v463
      %v465 = vpop.f32.mrf.mxu0
      %466 = vdwg.mxu0
      %v467 = vmax.f32 %v409, 0.0
      %v468 = vmax.f32 %v414, 0.0
      %v469 = vmax.f32 %v419, 0.0
      %v470 = vmax.f32 %v424, 0.0
      %v471 = vmax.f32 %v429, 0.0
      %v472 = vmax.f32 %v434, 0.0
      %v473 = vmax.f32 %v439, 0.0
      %v474 = vmax.f32 %v444, 0.0
      %v475 = vmax.f32 %v449, 0.0
      %v476 = vmax.f32 %v454, 0.0
      %v477 = vmax.f32 %v459, 0.0
      %v478 = vmax.f32 %v464, 0.0
      %v479 = vld [vmem:[%s3] sm:$0xff]
      %v480 = vld [vmem:[%s3 + $0x8] sm:$0xff]
      %v481 = vld [vmem:[%s3 + $0x10] sm:$0xff]
      %v482 = vld [vmem:[%s3 + $0x18] sm:$0xff]
      %v483 = vld [vmem:[%s3 + $0x20] sm:$0xff]
      %v484 = vld [vmem:[%s3 + $0x28] sm:$0xff]
      %v485 = vld [vmem:[%s3 + $0x30] sm:$0xff]
      %v486 = vld [vmem:[%s3 + $0x38] sm:$0xff]
      %v487 = vld [vmem:[%s3 + $0x40] sm:$0xff]
      %v488 = vld [vmem:[%s3 + $0x48] sm:$0xff]
      %v489 = vld [vmem:[%s3 + $0x50] sm:$0xff]
      %v490 = vld [vmem:[%s3 + $0x58] sm:$0xff]
      %v491 = vld [vmem:[%s3 + $0x60] sm:$0xff]
      %v492 = vld [vmem:[%s3 + $0x68] sm:$0xff]
      %v493 = vld [vmem:[%s3 + $0x70] sm:$0xff]
      %v494 = vld [vmem:[%s3 + $0x78] sm:$0xff]
      %v495 = vld [vmem:[%s4] sm:$0x1]
      %v497 = vlaneseq
      %v498 = vshrl.u32 %v497, 7
      %v499 = vsub.s32 0, %v498
      %v500 = vrot.slane %v495, %v499
      %502 = vmatprep.subr.mxu0 0.0
      %503 = vmatpush1.msra.mxu0 %v494
      %504 = vmatprep.subr.mxu0 0.0
      %505 = vmatpush1.msra.mxu0 %v493
      %506 = vmatprep.subr.mxu0 0.0
      %507 = vmatpush1.msra.mxu0 %v492
      %508 = vmatprep.subr.mxu0 0.0
      %509 = vmatpush1.msra.mxu0 %v491
      %510 = vmatprep.subr.mxu0 0.0
      %511 = vmatpush1.msra.mxu0 %v490
      %512 = vmatprep.subr.mxu0 0.0
      %513 = vmatpush1.msra.mxu0 %v489
      %514 = vmatprep.subr.mxu0 0.0
      %515 = vmatpush1.msra.mxu0 %v488
      %516 = vmatprep.subr.mxu0 0.0
      %517 = vmatpush1.msra.mxu0 %v487
      %518 = vmatprep.subr.mxu0 0.0
      %519 = vmatpush1.msra.mxu0 %v486
      %520 = vmatprep.subr.mxu0 0.0
      %521 = vmatpush1.msra.mxu0 %v485
      %522 = vmatprep.subr.mxu0 0.0
      %523 = vmatpush1.msra.mxu0 %v484
      %524 = vmatprep.subr.mxu0 0.0
      %525 = vmatpush1.msra.mxu0 %v483
      %526 = vmatprep.subr.mxu0 0.0
      %527 = vmatpush1.msra.mxu0 %v482
      %528 = vmatprep.subr.mxu0 0.0
      %529 = vmatpush1.msra.mxu0 %v481
      %530 = vmatprep.subr.mxu0 0.0
      %531 = vmatpush1.msra.mxu0 %v480
      %532 = vmatprep.subr.mxu0 0.0
      %533 = vmatpush1.msra.mxu0 %v479
      %534 = vmatprep.subr.mxu0 0.0
      %535 = vmatpush2.msra.mxu0 0.0
      %536 = vmatprep.subr.mxu0 0.0
      %537 = vmatpush2.msra.mxu0 0.0
      %538 = vmatprep.subr.mxu0 0.0
      %539 = vmatpush2.msra.mxu0 0.0
      %540 = vmatprep.subr.mxu0 0.0
      %541 = vmatpush2.msra.mxu0 0.0
      %542 = vmatprep.subr.mxu0 0.0
      %543 = vmatpush2.msra.mxu0 0.0
      %544 = vmatprep.subr.mxu0 0.0
      %545 = vmatpush2.msra.mxu0 0.0
      %546 = vmatprep.subr.mxu0 0.0
      %547 = vmatpush2.msra.mxu0 0.0
      %548 = vmatprep.subr.mxu0 0.0
      %549 = vmatpush2.msra.mxu0 0.0
      %550 = vmatprep.subr.mxu0 0.0
      %551 = vmatpush2.msra.mxu0 0.0
      %552 = vmatprep.subr.mxu0 0.0
      %553 = vmatpush2.msra.mxu0 0.0
      %554 = vmatprep.subr.mxu0 0.0
      %555 = vmatpush2.msra.mxu0 0.0
      %556 = vmatprep.subr.mxu0 0.0
      %557 = vmatpush2.msra.mxu0 0.0
      %558 = vmatprep.subr.mxu0 0.0
      %559 = vmatpush2.msra.mxu0 0.0
      %560 = vmatprep.subr.mxu0 0.0
      %561 = vmatpush2.msra.mxu0 0.0
      %562 = vmatprep.subr.mxu0 0.0
      %563 = vmatpush2.msra.mxu0 0.0
      %564 = vmatprep.subr.mxu0 0.0
      %565 = vmatpush2.msra.mxu0 0.0
      %566 = vmatprep.mubr.f32.mxu0 0.0
      %567 = vmatmul.mubr.f32.gmra.mxu0 %v467
      %v568 = vpop.f32.mrf.mxu0
      %v569 = vadd.f32 %v500, %v568
      %v570 = vpop.f32.mrf.mxu0
      %571 = vmatprep.mubr.f32.mxu0 0.0
      %572 = vmatmul.mubr.f32.gmra.mxu0 %v468
      %v573 = vpop.f32.mrf.mxu0
      %v574 = vadd.f32 %v500, %v573
      %v575 = vpop.f32.mrf.mxu0
      %576 = vmatprep.mubr.f32.mxu0 0.0
      %577 = vmatmul.mubr.f32.gmra.mxu0 %v469
      %v578 = vpop.f32.mrf.mxu0
      %v579 = vadd.f32 %v500, %v578
      %v580 = vpop.f32.mrf.mxu0
      %581 = vmatprep.mubr.f32.mxu0 0.0
      %582 = vmatmul.mubr.f32.gmra.mxu0 %v470
      %v583 = vpop.f32.mrf.mxu0
      %v584 = vadd.f32 %v500, %v583
      %v585 = vpop.f32.mrf.mxu0
      %586 = vmatprep.mubr.f32.mxu0 0.0
      %587 = vmatmul.mubr.f32.gmra.mxu0 %v471
      %v588 = vpop.f32.mrf.mxu0
      %v589 = vadd.f32 %v500, %v588
      %v590 = vpop.f32.mrf.mxu0
      %591 = vmatprep.mubr.f32.mxu0 0.0
      %592 = vmatmul.mubr.f32.gmra.mxu0 %v472
      %v593 = vpop.f32.mrf.mxu0
      %v594 = vadd.f32 %v500, %v593
      %v595 = vpop.f32.mrf.mxu0
      %596 = vmatprep.mubr.f32.mxu0 0.0
      %597 = vmatmul.mubr.f32.gmra.mxu0 %v473
      %v598 = vpop.f32.mrf.mxu0
      %v599 = vadd.f32 %v500, %v598
      %v600 = vpop.f32.mrf.mxu0
      %601 = vmatprep.mubr.f32.mxu0 0.0
      %602 = vmatmul.mubr.f32.gmra.mxu0 %v474
      %v603 = vpop.f32.mrf.mxu0
      %v604 = vadd.f32 %v500, %v603
      %v605 = vpop.f32.mrf.mxu0
      %606 = vmatprep.mubr.f32.mxu0 0.0
      %607 = vmatmul.mubr.f32.gmra.mxu0 %v475
      %v608 = vpop.f32.mrf.mxu0
      %v609 = vadd.f32 %v500, %v608
      %v610 = vpop.f32.mrf.mxu0
      %611 = vmatprep.mubr.f32.mxu0 0.0
      %612 = vmatmul.mubr.f32.gmra.mxu0 %v476
      %v613 = vpop.f32.mrf.mxu0
      %v614 = vadd.f32 %v500, %v613
      %v615 = vpop.f32.mrf.mxu0
      %616 = vmatprep.mubr.f32.mxu0 0.0
      %617 = vmatmul.mubr.f32.gmra.mxu0 %v477
      %v618 = vpop.f32.mrf.mxu0
      %v619 = vadd.f32 %v500, %v618
      %v620 = vpop.f32.mrf.mxu0
      %621 = vmatprep.mubr.f32.mxu0 0.0
      %622 = vmatmul.mubr.f32.gmra.mxu0 %v478
      %v623 = vpop.f32.mrf.mxu0
      %v624 = vadd.f32 %v500, %v623
      %v625 = vpop.f32.mrf.mxu0
      %626 = vdwg.mxu0
      %v627 = vmax.f32 %v569, 0.0
      %v628 = vmax.f32 %v574, 0.0
      %v629 = vmax.f32 %v579, 0.0
      %v630 = vmax.f32 %v584, 0.0
      %v631 = vmax.f32 %v589, 0.0
      %v632 = vmax.f32 %v594, 0.0
      %v633 = vmax.f32 %v599, 0.0
      %v634 = vmax.f32 %v604, 0.0
      %v635 = vmax.f32 %v609, 0.0
      %v636 = vmax.f32 %v614, 0.0
      %v637 = vmax.f32 %v619, 0.0
      %v638 = vmax.f32 %v624, 0.0
      %v639 = vld [vmem:[%s5] sm:$0xff]
      %v640 = vld [vmem:[%s5 + $0x8] sm:$0xff]
      %v641 = vld [vmem:[%s5 + $0x10] sm:$0xff]
      %v642 = vld [vmem:[%s5 + $0x18] sm:$0xff]
      %v643 = vld [vmem:[%s5 + $0x20] sm:$0xff]
      %v644 = vld [vmem:[%s5 + $0x28] sm:$0xff]
      %v645 = vld [vmem:[%s5 + $0x30] sm:$0xff]
      %v646 = vld [vmem:[%s5 + $0x38] sm:$0xff]
      %v647 = vld [vmem:[%s5 + $0x40] sm:$0xff]
      %v648 = vld [vmem:[%s5 + $0x48] sm:$0xff]
      %v649 = vld [vmem:[%s5 + $0x50] sm:$0xff]
      %v650 = vld [vmem:[%s5 + $0x58] sm:$0xff]
      %v651 = vld [vmem:[%s5 + $0x60] sm:$0xff]
      %v652 = vld [vmem:[%s5 + $0x68] sm:$0xff]
      %v653 = vld [vmem:[%s5 + $0x70] sm:$0xff]
      %v654 = vld [vmem:[%s5 + $0x78] sm:$0xff]
      %v655 = vld [vmem:[%s6] sm:$0x1]
      %v657 = vlaneseq
      %v658 = vshrl.u32 %v657, 7
      %v659 = vsub.s32 0, %v658
      %v660 = vrot.slane %v655, %v659
      %662 = vmatprep.subr.mxu0 0.0
      %663 = vmatpush1.msra.mxu0 %v654
      %664 = vmatprep.subr.mxu0 0.0
      %665 = vmatpush1.msra.mxu0 %v653
      %666 = vmatprep.subr.mxu0 0.0
      %667 = vmatpush1.msra.mxu0 %v652
      %668 = vmatprep.subr.mxu0 0.0
      %669 = vmatpush1.msra.mxu0 %v651
      %670 = vmatprep.subr.mxu0 0.0
      %671 = vmatpush1.msra.mxu0 %v650
      %672 = vmatprep.subr.mxu0 0.0
      %673 = vmatpush1.msra.mxu0 %v649
      %674 = vmatprep.subr.mxu0 0.0
      %675 = vmatpush1.msra.mxu0 %v648
      %676 = vmatprep.subr.mxu0 0.0
      %677 = vmatpush1.msra.mxu0 %v647
      %678 = vmatprep.subr.mxu0 0.0
      %679 = vmatpush1.msra.mxu0 %v646
      %680 = vmatprep.subr.mxu0 0.0
      %681 = vmatpush1.msra.mxu0 %v645
      %682 = vmatprep.subr.mxu0 0.0
      %683 = vmatpush1.msra.mxu0 %v644
      %684 = vmatprep.subr.mxu0 0.0
      %685 = vmatpush1.msra.mxu0 %v643
      %686 = vmatprep.subr.mxu0 0.0
      %687 = vmatpush1.msra.mxu0 %v642
      %688 = vmatprep.subr.mxu0 0.0
      %689 = vmatpush1.msra.mxu0 %v641
      %690 = vmatprep.subr.mxu0 0.0
      %691 = vmatpush1.msra.mxu0 %v640
      %692 = vmatprep.subr.mxu0 0.0
      %693 = vmatpush1.msra.mxu0 %v639
      %694 = vmatprep.subr.mxu0 0.0
      %695 = vmatpush2.msra.mxu0 0.0
      %696 = vmatprep.subr.mxu0 0.0
      %697 = vmatpush2.msra.mxu0 0.0
      %698 = vmatprep.subr.mxu0 0.0
      %699 = vmatpush2.msra.mxu0 0.0
      %700 = vmatprep.subr.mxu0 0.0
      %701 = vmatpush2.msra.mxu0 0.0
      %702 = vmatprep.subr.mxu0 0.0
      %703 = vmatpush2.msra.mxu0 0.0
      %704 = vmatprep.subr.mxu0 0.0
      %705 = vmatpush2.msra.mxu0 0.0
      %706 = vmatprep.subr.mxu0 0.0
      %707 = vmatpush2.msra.mxu0 0.0
      %708 = vmatprep.subr.mxu0 0.0
      %709 = vmatpush2.msra.mxu0 0.0
      %710 = vmatprep.subr.mxu0 0.0
      %711 = vmatpush2.msra.mxu0 0.0
      %712 = vmatprep.subr.mxu0 0.0
      %713 = vmatpush2.msra.mxu0 0.0
      %714 = vmatprep.subr.mxu0 0.0
      %715 = vmatpush2.msra.mxu0 0.0
      %716 = vmatprep.subr.mxu0 0.0
      %717 = vmatpush2.msra.mxu0 0.0
      %718 = vmatprep.subr.mxu0 0.0
      %719 = vmatpush2.msra.mxu0 0.0
      %720 = vmatprep.subr.mxu0 0.0
      %721 = vmatpush2.msra.mxu0 0.0
      %722 = vmatprep.subr.mxu0 0.0
      %723 = vmatpush2.msra.mxu0 0.0
      %724 = vmatprep.subr.mxu0 0.0
      %725 = vmatpush2.msra.mxu0 0.0
      %726 = vmatprep.mubr.f32.mxu0 0.0
      %727 = vmatmul.mubr.f32.gmra.mxu0 %v627
      %v728 = vpop.f32.mrf.mxu0
      %v729 = vadd.f32 %v660, %v728
      %v730 = vpop.f32.mrf.mxu0
      %731 = vmatprep.mubr.f32.mxu0 0.0
      %732 = vmatmul.mubr.f32.gmra.mxu0 %v628
      %v733 = vpop.f32.mrf.mxu0
      %v734 = vadd.f32 %v660, %v733
      %v735 = vpop.f32.mrf.mxu0
      %736 = vmatprep.mubr.f32.mxu0 0.0
      %737 = vmatmul.mubr.f32.gmra.mxu0 %v629
      %v738 = vpop.f32.mrf.mxu0
      %v739 = vadd.f32 %v660, %v738
      %v740 = vpop.f32.mrf.mxu0
      %741 = vmatprep.mubr.f32.mxu0 0.0
      %742 = vmatmul.mubr.f32.gmra.mxu0 %v630
      %v743 = vpop.f32.mrf.mxu0
      %v744 = vadd.f32 %v660, %v743
      %v745 = vpop.f32.mrf.mxu0
      %746 = vmatprep.mubr.f32.mxu0 0.0
      %747 = vmatmul.mubr.f32.gmra.mxu0 %v631
      %v748 = vpop.f32.mrf.mxu0
      %v749 = vadd.f32 %v660, %v748
      %v750 = vpop.f32.mrf.mxu0
      %751 = vmatprep.mubr.f32.mxu0 0.0
      %752 = vmatmul.mubr.f32.gmra.mxu0 %v632
      %v753 = vpop.f32.mrf.mxu0
      %v754 = vadd.f32 %v660, %v753
      %v755 = vpop.f32.mrf.mxu0
      %756 = vmatprep.mubr.f32.mxu0 0.0
      %757 = vmatmul.mubr.f32.gmra.mxu0 %v633
      %v758 = vpop.f32.mrf.mxu0
      %v759 = vadd.f32 %v660, %v758
      %v760 = vpop.f32.mrf.mxu0
      %761 = vmatprep.mubr.f32.mxu0 0.0
      %762 = vmatmul.mubr.f32.gmra.mxu0 %v634
      %v763 = vpop.f32.mrf.mxu0
      %v764 = vadd.f32 %v660, %v763
      %v765 = vpop.f32.mrf.mxu0
      %766 = vmatprep.mubr.f32.mxu0 0.0
      %767 = vmatmul.mubr.f32.gmra.mxu0 %v635
      %v768 = vpop.f32.mrf.mxu0
      %v769 = vadd.f32 %v660, %v768
      %v770 = vpop.f32.mrf.mxu0
      %771 = vmatprep.mubr.f32.mxu0 0.0
      %772 = vmatmul.mubr.f32.gmra.mxu0 %v636
      %v773 = vpop.f32.mrf.mxu0
      %v774 = vadd.f32 %v660, %v773
      %v775 = vpop.f32.mrf.mxu0
      %776 = vmatprep.mubr.f32.mxu0 0.0
      %777 = vmatmul.mubr.f32.gmra.mxu0 %v637
      %v778 = vpop.f32.mrf.mxu0
      %v779 = vadd.f32 %v660, %v778
      %v780 = vpop.f32.mrf.mxu0
      %781 = vmatprep.mubr.f32.mxu0 0.0
      %782 = vmatmul.mubr.f32.gmra.mxu0 %v638
      %v783 = vpop.f32.mrf.mxu0
      %v784 = vadd.f32 %v660, %v783
      %v785 = vpop.f32.mrf.mxu0
      %786 = vdwg.mxu0
      %vm787 = vcmask 64512
      %788 = vst.msk [vmem:[%s280] sm:$0xff] %vm787, %v729
      %789 = vst.msk [vmem:[%s280 + $0x8] sm:$0xff] %vm787, %v734
      %790 = vst.msk [vmem:[%s280 + $0x10] sm:$0xff] %vm787, %v739
      %791 = vst.msk [vmem:[%s280 + $0x18] sm:$0xff] %vm787, %v744
      %792 = vst.msk [vmem:[%s280 + $0x20] sm:$0xff] %vm787, %v749
      %793 = vst.msk [vmem:[%s280 + $0x28] sm:$0xff] %vm787, %v754
      %794 = vst.msk [vmem:[%s280 + $0x30] sm:$0xff] %vm787, %v759
      %795 = vst.msk [vmem:[%s280 + $0x38] sm:$0xff] %vm787, %v764
      %796 = vst.msk [vmem:[%s280 + $0x40] sm:$0xff] %vm787, %v769
      %797 = vst.msk [vmem:[%s280 + $0x48] sm:$0xff] %vm787, %v774
      %798 = vst.msk [vmem:[%s280 + $0x50] sm:$0xff] %vm787, %v779
      %799 = vst.msk [vmem:[%s280 + $0x58] sm:$0xff] %vm787, %v784
      %s800 = smul.u32 12, %s18
      %p801 = scmp.lt.s32.totalorder %s800, 47
      %s802 = scalar_select %p801, %s800, 47
      %s803 = smul.addr %s802, 8
      %s804 = scalar_lea.vmem %s7, %s803
      // Predicated region
      $region49: #{tpu_custom_call.1} parent=47 // pred_check
        %p805 = pneg %p188
      $region50: #{tpu_custom_call.1} parent=47 // pred_check_branch
        %807 = sbr.rel (%p805) target = $region52
      $region51: #{tpu_custom_call.1} parent=47 // pred_region
        %s808 = smul.u32 12, %s18
      $region52: #{tpu_custom_call.1} parent=47 // pred_fallthru
        _
    $region48: #{tpu_custom_call.1} parent=5 // pred_fallthru
      _
    %p809 = scmp.le.s32.totalorder 2, %s13
    // Predicated region
    $region53: #{tpu_custom_call.1} parent=5 // pred_check
      %p810 = pneg %p809
    $region54: #{tpu_custom_call.1} parent=5 // pred_check_branch
      %812 = sbr.rel (%p810) target = $region56
    $region55: #{tpu_custom_call.1} parent=5 // pred_region
      %s813 = ssub.s32 %s13, 2
      // Predicated region
      $region57: #{tpu_custom_call.1} parent=55 // pred_check
        %p814 = pneg %p194
      $region58: #{tpu_custom_call.1} parent=55 // pred_check_branch
        %816 = sbr.rel (%p814) target = $region60
      $region59: #{tpu_custom_call.1} parent=55 // pred_region
        %s817 = smul.u32 12, %s19
        %p818 = scmp.lt.s32.totalorder %s817, 47
        %s819 = scalar_select %p818, %s817, 47
        %s820 = smul.addr %s819, 8
        %s821 = scalar_lea.vmem %s7, %s820
      $region60: #{tpu_custom_call.1} parent=55 // pred_fallthru
        _
    $region56: #{tpu_custom_call.1} parent=5 // pred_fallthru
      _
  $region6: #{tpu_custom_call.1} parent=0 // loop_footer
    %s17 = sadd.s32 1, %s13
  $region7: #{tpu_custom_call.1} parent=0 // loop_footer_branch
    %12 = sbr.rel target = $region3
  $region8: #{tpu_custom_call.1} parent=0 // loop_exit
    _

</llo_original>
